<compile_context>
chip_gen: v7x
topology: tpu7x:2x2x1
jax: 0.10.0
libtpu: 0.0.40
codegen_flags: <defaults>
</compile_context>

<pallas_src>
import jax
import jax.numpy as jnp
import numpy as np
from jax.experimental import pallas as pl
from jax.experimental.pallas import tpu as pltpu


def _mlp_body(x_bf16, w1_ref, b1_ref, w2_ref, b2_ref, out_ref):
    """Linear -> SiLU -> (Dropout = identity at eval) -> Linear on one batch tile."""
    h = jnp.dot(x_bf16, w1_ref[...], preferred_element_type=jnp.float32) + b1_ref[...]
    h = h * jax.nn.sigmoid(h)
    # TODO(synk): training-mode Dropout would draw a mask here with
    # pltpu.prng_seed + pltpu.stateful_bernoulli; eval mode is identity.
    y = jnp.dot(h.astype(jnp.bfloat16), w2_ref[...],
                preferred_element_type=jnp.float32) + b2_ref[...]
    out_ref[...] = y.astype(out_ref.dtype)


def _gather_mlp_kernel(idx_ref, emb_ref, w1_ref, b1_ref, w2_ref, b2_ref,
                       out_ref, x_buf):
    # idx_ref : [B_pad] int32 in SMEM (scalar prefetch)
    # emb_ref : [U, D] embedding table, VMEM-resident (constant index_map)
    # w1/w2   : [D, D] bf16 ([in, out] layout so y = x @ W + b), VMEM-resident
    # b1/b2   : [1, D] f32
    # out_ref : [TB, D] output tile
    # x_buf   : [TB, D] f32 scratch holding the gathered rows
    i = pl.program_id(0)
    tb = out_ref.shape[0]
    base = i * tb

    # Rolled gather: TB cheap in-VMEM dynamic-slice loads (no HBM DMAs, small
    # instruction footprint regardless of TB).
    @pl.loop(0, tb)
    def _(r):
        row = idx_ref[base + r]
        x_buf[pl.ds(r, 1), :] = emb_ref[pl.ds(row, 1), :].astype(jnp.float32)

    _mlp_body(x_buf[...].astype(jnp.bfloat16), w1_ref, b1_ref, w2_ref, b2_ref, out_ref)


def _mlp_kernel(x_ref, w1_ref, b1_ref, w2_ref, b2_ref, out_ref):
    # Big-table fallback: rows were gathered in the wrapper; x_ref is a
    # pipeline-prefetched (TB, D) tile.
    _mlp_body(x_ref[...].astype(jnp.bfloat16), w1_ref, b1_ref, w2_ref, b2_ref, out_ref)


def _round_up(x, m):
    return (x + m - 1) // m * m


def _pick_batch_tile(batch):
    # >= 2 grid steps when B > 8 so v7x's two TensorCores both get work; cap at
    # 256 so a tile fills v6e's 256-wide MXU without bloating VMEM.  (On v5e the
    # 128-wide MXU is already matched well before the cap.)
    if batch <= 8:
        return 8
    return min(256, _round_up((batch + 1) // 2, 8))


def user_condition_encoder(user_indices, emb_table, w1, b1, w2, b2, *,
                           out_dtype=jnp.float32,
                           vmem_table_budget=4 * 1024 * 1024):
    """user_indices: [B] int -> [B, D] out_dtype.

    w1 / w2 are stored as [in, out] (transposed relative to nn.Linear.weight)
    so the kernel computes x @ W + b.
    """
    B = int(user_indices.shape[0])
    U, D = emb_table.shape

    TB = _pick_batch_tile(B)
    B_pad = _round_up(B, TB)
    grid = (B_pad // TB,)

    # Clamp (PyTorch would raise on OOB ids) and pad the batch to a tile multiple.
    idx = jnp.clip(user_indices.astype(jnp.int32), 0, U - 1)
    if B_pad != B:
        idx = jnp.pad(idx, (0, B_pad - B))

    # Weights are tiny (D x D) and fully consumed every call -> cast to the
    # MXU-native bf16 here.  The big embedding table is deliberately NOT cast:
    # we only ever touch the B gathered rows.
    w1_bf = w1.astype(jnp.bfloat16)
    w2_bf = w2.astype(jnp.bfloat16)
    b1_2d = b1.reshape(1, D).astype(jnp.float32)
    b2_2d = b2.reshape(1, D).astype(jnp.float32)

    out_itemsize = np.dtype(out_dtype).itemsize
    flops = 2 * 2 * B_pad * D * D                  # two [TB,D]x[D,D] matmuls per tile
    weight_bytes = 2 * D * D * 2 + 2 * D * 4       # bf16 weights + f32 biases
    table_bytes = U * D * emb_table.dtype.itemsize

    if table_bytes <= vmem_table_budget:
        # ---- Path A: VMEM-resident table, gather fused in the kernel. ----
        vmem_limit = int(min(
            64 * 1024 * 1024,
            max(16 * 1024 * 1024,
                2 * table_bytes + 4 * weight_bytes + 4 * TB * D * (4 + out_itemsize))))

        grid_spec = pltpu.PrefetchScalarGridSpec(
            num_scalar_prefetch=1,
            grid=grid,
            in_specs=[
                # Constant index_map -> fetched once, stays VMEM-resident.
                pl.BlockSpec((U, D), lambda i, idx_ref: (0, 0)),   # embedding table
                pl.BlockSpec((D, D), lambda i, idx_ref: (0, 0)),   # w1
                pl.BlockSpec((1, D), lambda i, idx_ref: (0, 0)),   # b1
                pl.BlockSpec((D, D), lambda i, idx_ref: (0, 0)),   # w2
                pl.BlockSpec((1, D), lambda i, idx_ref: (0, 0)),   # b2
            ],
            out_specs=pl.BlockSpec((TB, D), lambda i, idx_ref: (i, 0)),
            scratch_shapes=[pltpu.VMEM((TB, D), jnp.float32)],     # gathered rows
        )
        out = pl.pallas_call(
            _gather_mlp_kernel,
            grid_spec=grid_spec,
            out_shape=jax.ShapeDtypeStruct((B_pad, D), out_dtype),
            compiler_params=pltpu.CompilerParams(
                dimension_semantics=("parallel",),
                vmem_limit_bytes=vmem_limit,
            ),
            cost_estimate=pl.CostEstimate(
                flops=flops,
                transcendentals=B_pad * D,
                bytes_accessed=int(table_bytes + weight_bytes
                                   + B_pad * D * out_itemsize + B_pad * 4),
            ),
        )(idx, emb_table, w1_bf, b1_2d, w2_bf, b2_2d)
    else:
        # ---- Path B: big-table fallback.  Gather only the B_pad requested rows
        # with an XLA gather in the wrapper; the (TB, D) tiles then flow through
        # the standard BlockSpec pipeline (prefetched behind the previous tile's
        # matmuls).  VMEM footprint stays independent of num_users.
        x_rows = jnp.take(emb_table, idx, axis=0).astype(jnp.float32)
        vmem_limit = int(min(
            64 * 1024 * 1024,
            max(16 * 1024 * 1024,
                4 * weight_bytes + 4 * TB * D * (4 + out_itemsize))))
        out = pl.pallas_call(
            _mlp_kernel,
            grid=grid,
            in_specs=[
                pl.BlockSpec((TB, D), lambda i: (i, 0)),           # gathered rows
                pl.BlockSpec((D, D), lambda i: (0, 0)),            # w1
                pl.BlockSpec((1, D), lambda i: (0, 0)),            # b1
                pl.BlockSpec((D, D), lambda i: (0, 0)),            # w2
                pl.BlockSpec((1, D), lambda i: (0, 0)),            # b2
            ],
            out_specs=pl.BlockSpec((TB, D), lambda i: (i, 0)),
            out_shape=jax.ShapeDtypeStruct((B_pad, D), out_dtype),
            compiler_params=pltpu.CompilerParams(
                dimension_semantics=("parallel",),
                vmem_limit_bytes=vmem_limit,
            ),
            cost_estimate=pl.CostEstimate(
                flops=flops,
                transcendentals=B_pad * D,
                bytes_accessed=int(B_pad * D * 4 + weight_bytes
                                   + B_pad * D * out_itemsize),
            ),
        )(x_rows, w1_bf, b1_2d, w2_bf, b2_2d)

    return out[:B]


def _reference(user_indices, emb_table, w1, b1, w2, b2):
    """Pure-JAX reference mirroring the kernel's bf16-weight / f32-accumulate numerics."""
    x = emb_table[user_indices].astype(jnp.bfloat16).astype(jnp.float32)
    h = x @ w1.astype(jnp.bfloat16).astype(jnp.float32) + b1
    h = h * jax.nn.sigmoid(h)
    h = h.astype(jnp.bfloat16).astype(jnp.float32)
    return h @ w2.astype(jnp.bfloat16).astype(jnp.float32) + b2


if __name__ == "__main__":
    # Small deterministic config consistent with the module (scaled-down embed_dim).
    num_users = 1000
    embed_dim = 128
    batch = 8

    key = jax.random.PRNGKey(0)
    k_emb, k_w1, k_b1, k_w2, k_b2, k_idx, k_idx2 = jax.random.split(key, 7)

    # nn.Embedding weight ~ N(0, 0.02^2); Linear params small normal init.
    emb_table = 0.02 * jax.random.normal(k_emb, (num_users, embed_dim), jnp.float32)
    w1 = 0.05 * jax.random.normal(k_w1, (embed_dim, embed_dim), jnp.float32)  # [in, out]
    b1 = 0.05 * jax.random.normal(k_b1, (embed_dim,), jnp.float32)
    w2 = 0.05 * jax.random.normal(k_w2, (embed_dim, embed_dim), jnp.float32)  # [in, out]
    b2 = 0.05 * jax.random.normal(k_b2, (embed_dim,), jnp.float32)

    user_indices = jax.random.randint(k_idx, (batch,), 0, num_users, jnp.int32)
    ref = _reference(user_indices, emb_table, w1, b1, w2, b2)

    # Path A: table held VMEM-resident, gather fused in the kernel.
    out_a = jax.block_until_ready(
        user_condition_encoder(user_indices, emb_table, w1, b1, w2, b2))
    assert out_a.shape == (batch, embed_dim)
    err_a = float(jnp.max(jnp.abs(out_a - ref)))
    assert jnp.allclose(out_a, ref, atol=2e-3, rtol=2e-3), f"path A mismatch {err_a}"

    # Path B: big-table fallback (wrapper gather + pipelined MLP kernel), forced here.
    out_b = jax.block_until_ready(
        user_condition_encoder(user_indices, emb_table, w1, b1, w2, b2,
                               vmem_table_budget=0))
    err_b = float(jnp.max(jnp.abs(out_b - ref)))
    assert jnp.allclose(out_b, ref, atol=2e-3, rtol=2e-3), f"path B mismatch {err_b}"

    # Uneven batch: exercises padding and a multi-step ("parallel") grid.
    idx2 = jax.random.randint(k_idx2, (20,), 0, num_users, jnp.int32)
    out_c = jax.block_until_ready(
        user_condition_encoder(idx2, emb_table, w1, b1, w2, b2))
    ref_c = _reference(idx2, emb_table, w1, b1, w2, b2)
    assert out_c.shape == (20, embed_dim)
    err_c = float(jnp.max(jnp.abs(out_c - ref_c)))
    assert jnp.allclose(out_c, ref_c, atol=2e-3, rtol=2e-3), f"padded-batch mismatch {err_c}"

    print("KERNEL_OK")
</pallas_src>

<mosaic_0001>
module attributes {stable_mosaic.version = 11 : i64} {
  func.func @_gather_mlp_kernel(%arg0: i32, %arg1: memref<8xi32, #tpu.memory_space<smem>>, %arg2: memref<1000x128xf32, #tpu.memory_space<vmem>>, %arg3: memref<128x128xbf16, #tpu.memory_space<vmem>>, %arg4: memref<1x128xf32, #tpu.memory_space<vmem>>, %arg5: memref<128x128xbf16, #tpu.memory_space<vmem>>, %arg6: memref<1x128xf32, #tpu.memory_space<vmem>>, %arg7: memref<8x128xf32, #tpu.memory_space<vmem>>, %arg8: memref<8x128xf32, #tpu.memory_space<vmem>>) attributes {dimension_semantics = [#tpu.dimension_semantics<parallel>], iteration_bounds = array<i64: 1>, scalar_prefetch = 1 : i64, scratch_operands = 1 : i64, tpu.core_type = #tpu.core_type<tc>, window_params = [{pipeline_mode = #tpu.pipeline_mode<synchronous>, transform_indices = @transform_0, window_bounds = array<i64: 1000, 128>}, {pipeline_mode = #tpu.pipeline_mode<synchronous>, transform_indices = @transform_1, window_bounds = array<i64: 128, 128>}, {pipeline_mode = #tpu.pipeline_mode<synchronous>, transform_indices = @transform_2, window_bounds = array<i64: 1, 128>}, {pipeline_mode = #tpu.pipeline_mode<synchronous>, transform_indices = @transform_3, window_bounds = array<i64: 128, 128>}, {pipeline_mode = #tpu.pipeline_mode<synchronous>, transform_indices = @transform_4, window_bounds = array<i64: 1, 128>}, {transform_indices = @transform_5, window_bounds = array<i64: 8, 128>}]} {
    %c8_i32 = arith.constant 8 : i32
    %0 = arith.muli %arg0, %c8_i32 : i32
    %c0_i32 = arith.constant 0 : i32
    %c8_i32_0 = arith.constant 8 : i32
    %1 = arith.addi %c0_i32, %c8_i32_0 : i32
    %c1_i32 = arith.constant 1 : i32
    scf.for %arg9 = %c0_i32 to %1 step %c1_i32  : i32 {
      %c1_i32_15 = arith.constant 1 : i32
      %22 = arith.muli %arg9, %c1_i32_15 : i32
      %c0_i32_16 = arith.constant 0 : i32
      %23 = arith.addi %c0_i32_16, %22 : i32
      %24 = arith.addi %0, %23 : i32
      %25 = arith.index_cast %24 : i32 to index
      %26 = memref.load %arg1[%25] : memref<8xi32, #tpu.memory_space<smem>>
      %27 = arith.index_cast %26 : i32 to index
      %c0_17 = arith.constant 0 : index
      %28 = vector.load %arg2[%27, %c0_17] : memref<1000x128xf32, #tpu.memory_space<vmem>>, vector<1x128xf32>
      %29 = arith.index_cast %23 : i32 to index
      %c0_18 = arith.constant 0 : index
      %30 = vector.load %arg8[%29, %c0_18] : memref<8x128xf32, #tpu.memory_space<vmem>>, vector<1x128xf32>
      tpu.vector_store %arg8[%29, %c0_18], %28 {strides = array<i32>} : memref<8x128xf32, #tpu.memory_space<vmem>>, vector<1x128xf32>,
    }
    %c8_i32_1 = arith.constant 8 : i32
    %c0 = arith.constant 0 : index
    %c0_2 = arith.constant 0 : index
    %2 = vector.load %arg8[%c0, %c0_2] : memref<8x128xf32, #tpu.memory_space<vmem>>, vector<8x128xf32>
    %3 = arith.truncf %2 : vector<8x128xf32> to vector<8x128xbf16>
    %c0_3 = arith.constant 0 : index
    %c0_4 = arith.constant 0 : index
    %4 = vector.load %arg3[%c0_3, %c0_4] : memref<128x128xbf16, #tpu.memory_space<vmem>>, vector<128x128xbf16>
    %cst = arith.constant dense<0.000000e+00> : vector<8x128xf32>
    %5 = tpu.matmul %3, %4, %cst {dimension_numbers = #tpu.dot_dimension_numbers<[1], [0], [0], [1], [0, 0, 1, 1], [], []>} : vector<8x128xbf16>, vector<128x128xbf16>, vector<8x128xf32> -> vector<8x128xf32>
    %c0_5 = arith.constant 0 : index
    %c0_6 = arith.constant 0 : index
    %6 = vector.load %arg4[%c0_5, %c0_6] : memref<1x128xf32, #tpu.memory_space<vmem>>, vector<1x128xf32>
    %7 = vector.broadcast %6 : vector<1x128xf32> to vector<8x128xf32>
    %8 = arith.addf %5, %7 : vector<8x128xf32>
    %9 = arith.negf %8 : vector<8x128xf32>
    %10 = math.exp %9 : vector<8x128xf32>
    %cst_7 = arith.constant 1.000000e+00 : f32
    %11 = vector.broadcast %cst_7 : f32 to vector<8x128xf32>
    %12 = arith.addf %11, %10 : vector<8x128xf32>
    %13 = arith.divf %11, %12 : vector<8x128xf32>
    %14 = arith.mulf %8, %13 : vector<8x128xf32>
    %15 = arith.truncf %14 : vector<8x128xf32> to vector<8x128xbf16>
    %c0_8 = arith.constant 0 : index
    %c0_9 = arith.constant 0 : index
    %16 = vector.load %arg5[%c0_8, %c0_9] : memref<128x128xbf16, #tpu.memory_space<vmem>>, vector<128x128xbf16>
    %cst_10 = arith.constant dense<0.000000e+00> : vector<8x128xf32>
    %17 = tpu.matmul %15, %16, %cst_10 {dimension_numbers = #tpu.dot_dimension_numbers<[1], [0], [0], [1], [0, 0, 1, 1], [], []>} : vector<8x128xbf16>, vector<128x128xbf16>, vector<8x128xf32> -> vector<8x128xf32>
    %c0_11 = arith.constant 0 : index
    %c0_12 = arith.constant 0 : index
    %18 = vector.load %arg6[%c0_11, %c0_12] : memref<1x128xf32, #tpu.memory_space<vmem>>, vector<1x128xf32>
    %19 = vector.broadcast %18 : vector<1x128xf32> to vector<8x128xf32>
    %20 = arith.addf %17, %19 : vector<8x128xf32>
    %c0_13 = arith.constant 0 : index
    %c0_14 = arith.constant 0 : index
    %21 = vector.load %arg7[%c0_13, %c0_14] : memref<8x128xf32, #tpu.memory_space<vmem>>, vector<8x128xf32>
    tpu.vector_store %arg7[%c0_13, %c0_14], %20 {strides = array<i32>} : memref<8x128xf32, #tpu.memory_space<vmem>>, vector<8x128xf32>,
    return
  }
  func.func @transform_0(%arg0: i32, %arg1: memref<8xi32, #tpu.memory_space<smem>>) -> (i32, i32) {
    %c0_i32 = arith.constant 0 : i32
    %c0_i32_0 = arith.constant 0 : i32
    %c0_i32_1 = arith.constant 0 : i32
    return %c0_i32, %c0_i32_0 : i32, i32
  }
  func.func @transform_1(%arg0: i32, %arg1: memref<8xi32, #tpu.memory_space<smem>>) -> (i32, i32) {
    %c0_i32 = arith.constant 0 : i32
    %c0_i32_0 = arith.constant 0 : i32
    %c0_i32_1 = arith.constant 0 : i32
    return %c0_i32, %c0_i32_0 : i32, i32
  }
  func.func @transform_2(%arg0: i32, %arg1: memref<8xi32, #tpu.memory_space<smem>>) -> (i32, i32) {
    %c0_i32 = arith.constant 0 : i32
    %c0_i32_0 = arith.constant 0 : i32
    %c0_i32_1 = arith.constant 0 : i32
    return %c0_i32, %c0_i32_0 : i32, i32
  }
  func.func @transform_3(%arg0: i32, %arg1: memref<8xi32, #tpu.memory_space<smem>>) -> (i32, i32) {
    %c0_i32 = arith.constant 0 : i32
    %c0_i32_0 = arith.constant 0 : i32
    %c0_i32_1 = arith.constant 0 : i32
    return %c0_i32, %c0_i32_0 : i32, i32
  }
  func.func @transform_4(%arg0: i32, %arg1: memref<8xi32, #tpu.memory_space<smem>>) -> (i32, i32) {
    %c0_i32 = arith.constant 0 : i32
    %c0_i32_0 = arith.constant 0 : i32
    %c0_i32_1 = arith.constant 0 : i32
    return %c0_i32, %c0_i32_0 : i32, i32
  }
  func.func @transform_5(%arg0: i32, %arg1: memref<8xi32, #tpu.memory_space<smem>>) -> (i32, i32) {
    %c0_i32 = arith.constant 0 : i32
    %c0_i32_0 = arith.constant 0 : i32
    return %arg0, %c0_i32 : i32, i32
  }
}

</mosaic_0001>

<llo_original>
// kernel: tpu_custom_call.1
$region0: #{tpu_custom_call.1}
  #allocation0 [shape = 'u32[]', space=smem, size = 0x4, offset = 0x4, fixed_abs, tag = 'smem constant byte address 0x4 - core index']
  #allocation1 [shape = 'u32[144,128]{1,0:T(1,128)}', space=vmem, size = 0x12000, scoped, tag = 'internal scratch']
  #allocation2 [shape = 'f32[8,128]{1,0:T(8,128)}', space=vmem, size = 0x1000, scoped, tag = 'scratch operand']
  #allocation3 [shape = 's32[1]{0}', space=sflag, size = 0x4, scoped, tag = 'scoped memory for tpu_custom_call.1']
  #allocation4 [shape = 'u8[512]{0}', space=smem, size = 0x200, scoped, tag = 'prefetched SMEM operand 0']
  %s0 = inlined_call_operand.hbm [shape: s32[8], index: 0, kind: input, shape index: {}]
  %s1 = inlined_call_operand.hbm [shape: f32[1000,128], index: 1, kind: input, shape index: {}]
  %s2 = inlined_call_operand.hbm [shape: bf16[128,128], index: 2, kind: input, shape index: {}]
  %s3 = inlined_call_operand.vmem [shape: f32[1,128], index: 3, kind: input, shape index: {}]
  %s4 = inlined_call_operand.hbm [shape: bf16[128,128], index: 4, kind: input, shape index: {}]
  %s5 = inlined_call_operand.vmem [shape: f32[1,128], index: 5, kind: input, shape index: {}]
  %s6 = inlined_call_operand.hbm [shape: f32[8,128], index: 6, kind: output, shape index: {}]
  %s7 = sld [smem:[#allocation0]]
  $region49: #{tpu_custom_call.1} parent=0
    _
  %s9 = ssub.s32 1, %s7
  %s10 = scalar_select 0, %s9, %s7
  %12 = dma.hbm_to_smem %s0, 16, [#allocation4], [#allocation3]
  %13 = dma.done [#allocation3], 16
  %14 = sfence
  $region1: #{tpu_custom_call.1} parent=0
    #allocation5 [shape = 'u8[512000]{0}', space=vmem, size = 0x7d000, scoped, tag = 'input window, operand 1, single buffered']
    #allocation6 [shape = 's32[1]{0}', space=sflag, size = 0x4, scoped, tag = 'scoped memory for tpu_custom_call.1']
    #allocation7 [shape = 's32[1]{0}', space=sflag, size = 0x4, scoped, tag = 'scoped memory for tpu_custom_call.1']
    #allocation8 [shape = 'u8[32768]{0}', space=vmem, size = 0x8000, scoped, tag = 'input window, operand 2, single buffered']
    #allocation9 [shape = 's32[1]{0}', space=sflag, size = 0x4, scoped, tag = 'scoped memory for tpu_custom_call.1']
    #allocation10 [shape = 'u8[32768]{0}', space=vmem, size = 0x8000, scoped, tag = 'input window, operand 4, single buffered']
    #allocation11 [shape = 'u8[4096]{0}', space=vmem, size = 0x1000, scoped, tag = 'output window, operand 0, single buffered']
    %15 = vsyncpa [#allocation6], 0
    %16 = vsyncpa [#allocation9], 0
    %17 = vsyncpa [#allocation7], 0
    // Predicated region
    $region2: #{tpu_custom_call.1} parent=1 // pred_check
      _
    $region3: #{tpu_custom_call.1} parent=1 // pred_check_branch
      %19 = sbr.rel (0) target = $region5
    $region4: #{tpu_custom_call.1} parent=1 // pred_region
      %s21 = ssub.s32 16000, 16000
      %22 = vsyncadd [#allocation6], %s21
      %s23 = sshll.u32 [#allocation5], 4
      %s24 = int_to_ptr.vmem [resolvable:$true] %s23
      %29 = dma.hbm_to_vmem [thread:$0]  %s1, 16000, %s24, [#allocation6], 128, 128, 8
    $region5: #{tpu_custom_call.1} parent=1 // pred_fallthru
      _
    // Predicated region
    $region6: #{tpu_custom_call.1} parent=1 // pred_check
      _
    $region7: #{tpu_custom_call.1} parent=1 // pred_check_branch
      %31 = sbr.rel (0) target = $region9
    $region8: #{tpu_custom_call.1} parent=1 // pred_region
      %s33 = ssub.s32 1024, 1024
      %34 = vsyncadd [#allocation9], %s33
      %s35 = sshll.u32 [#allocation8], 4
      %s36 = int_to_ptr.vmem [resolvable:$true] %s35
      %41 = dma.hbm_to_vmem [thread:$0]  %s2, 1024, %s36, [#allocation9], 64, 64, 4
    $region9: #{tpu_custom_call.1} parent=1 // pred_fallthru
      _
    // Predicated region
    $region10: #{tpu_custom_call.1} parent=1 // pred_check
      _
    $region11: #{tpu_custom_call.1} parent=1 // pred_check_branch
      %43 = sbr.rel (0) target = $region13
    $region12: #{tpu_custom_call.1} parent=1 // pred_region
      _
    $region13: #{tpu_custom_call.1} parent=1 // pred_fallthru
      _
    // Predicated region
    $region14: #{tpu_custom_call.1} parent=1 // pred_check
      _
    $region15: #{tpu_custom_call.1} parent=1 // pred_check_branch
      %45 = sbr.rel (0) target = $region17
    $region16: #{tpu_custom_call.1} parent=1 // pred_region
      %s47 = ssub.s32 1024, 1024
      %48 = vsyncadd [#allocation9], %s47
      %s49 = sshll.u32 [#allocation10], 4
      %s50 = int_to_ptr.vmem [resolvable:$true] %s49
      %55 = dma.hbm_to_vmem [thread:$0]  %s4, 1024, %s50, [#allocation9], 64, 64, 4
    $region17: #{tpu_custom_call.1} parent=1 // pred_fallthru
      _
    // Predicated region
    $region18: #{tpu_custom_call.1} parent=1 // pred_check
      _
    $region19: #{tpu_custom_call.1} parent=1 // pred_check_branch
      %57 = sbr.rel (0) target = $region21
    $region20: #{tpu_custom_call.1} parent=1 // pred_region
      _
    $region21: #{tpu_custom_call.1} parent=1 // pred_fallthru
      _
    // Predicated region
    $region22: #{tpu_custom_call.1} parent=1 // pred_check
      _
    $region23: #{tpu_custom_call.1} parent=1 // pred_check_branch
      %59 = sbr.rel (0) target = $region25
    $region24: #{tpu_custom_call.1} parent=1 // pred_region
      %60 = dma.done [#allocation6], 16000
    $region25: #{tpu_custom_call.1} parent=1 // pred_fallthru
      _
    // Predicated region
    $region26: #{tpu_custom_call.1} parent=1 // pred_check
      _
    $region27: #{tpu_custom_call.1} parent=1 // pred_check_branch
      %62 = sbr.rel (0) target = $region29
    $region28: #{tpu_custom_call.1} parent=1 // pred_region
      %63 = dma.done [#allocation9], 1024
    $region29: #{tpu_custom_call.1} parent=1 // pred_fallthru
      _
    // Predicated region
    $region30: #{tpu_custom_call.1} parent=1 // pred_check
      _
    $region31: #{tpu_custom_call.1} parent=1 // pred_check_branch
      %65 = sbr.rel (0) target = $region33
    $region32: #{tpu_custom_call.1} parent=1 // pred_region
      %66 = dma.done [#allocation9], 1024
    $region33: #{tpu_custom_call.1} parent=1 // pred_fallthru
      _
    %s68 = smul.u32 0, 8
    loop: start=0, step=1, limit=8
    $region34: #{tpu_custom_call.1} parent=1 // loop_pre_header
      _
    $region35: #{tpu_custom_call.1} parent=1 // loop_header
      %s70 = sphi 0, %s74
      %p71 = scmp.ge.s32.totalorder %s70, 8
    $region36: #{tpu_custom_call.1} parent=1 // loop_header_branch
      %73 = sbr.rel (%p71) target = $region40
    $region37: #{tpu_custom_call.1} parent=1 // loop_body
      %s75 = sadd.s32 %s68, %s70
      %s76 = sld [smem:[#allocation4 + %s75]]
      %s77 = scalar_lea.vmem [#allocation5], %s76
      %v78 = vld [vmem:[%s77] sm:$0x1]
      %s79 = scalar_lea.vmem [#allocation2], %s70
      %80 = vst [vmem:[%s79] sm:$0x1] %v78
    $region38: #{tpu_custom_call.1} parent=1 // loop_footer
      %s74 = sadd.s32 1, %s70
    $region39: #{tpu_custom_call.1} parent=1 // loop_footer_branch
      %69 = sbr.rel target = $region35
    $region40: #{tpu_custom_call.1} parent=1 // loop_exit
      _
    %v81 = vld [vmem:[#allocation2] sm:$0xff]
    %v82 = vpack.c.bf16 %v81, %v81
    %v83 = vld [vmem:[#allocation8] sm:$0xf]
    %v84 = vld [vmem:[#allocation8 + $0x4] sm:$0xf]
    %v85 = vld [vmem:[#allocation8 + $0x8] sm:$0xf]
    %v86 = vld [vmem:[#allocation8 + $0xc] sm:$0xf]
    %v87 = vld [vmem:[#allocation8 + $0x10] sm:$0xf]
    %v88 = vld [vmem:[#allocation8 + $0x14] sm:$0xf]
    %v89 = vld [vmem:[#allocation8 + $0x18] sm:$0xf]
    %v90 = vld [vmem:[#allocation8 + $0x1c] sm:$0xf]
    %v91 = vld [vmem:[#allocation8 + $0x20] sm:$0xf]
    %v92 = vld [vmem:[#allocation8 + $0x24] sm:$0xf]
    %v93 = vld [vmem:[#allocation8 + $0x28] sm:$0xf]
    %v94 = vld [vmem:[#allocation8 + $0x2c] sm:$0xf]
    %v95 = vld [vmem:[#allocation8 + $0x30] sm:$0xf]
    %v96 = vld [vmem:[#allocation8 + $0x34] sm:$0xf]
    %v97 = vld [vmem:[#allocation8 + $0x38] sm:$0xf]
    %v98 = vld [vmem:[#allocation8 + $0x3c] sm:$0xf]
    %v99 = vld [vmem:[%s3] sm:$0x1]
    %v101 = vlaneseq
    %v102 = vshrl.u32 %v101, 7
    %v103 = vsub.s32 0, %v102
    %v104 = vrot.slane %v99, %v103
    %v122 = vunpack.c.l.b16 %v83
    %v123 = vunpack.c.l.b16 %v84
    %v124 = vunpack.c.l.b16 %v85
    %v125 = vunpack.c.l.b16 %v86
    %v126 = vunpack.c.l.b16 %v87
    %v127 = vunpack.c.l.b16 %v88
    %v128 = vunpack.c.l.b16 %v89
    %v129 = vunpack.c.l.b16 %v90
    %v130 = vunpack.c.l.b16 %v91
    %v131 = vunpack.c.l.b16 %v92
    %v132 = vunpack.c.l.b16 %v93
    %v133 = vunpack.c.l.b16 %v94
    %v134 = vunpack.c.l.b16 %v95
    %v135 = vunpack.c.l.b16 %v96
    %v136 = vunpack.c.l.b16 %v97
    %v137 = vunpack.c.l.b16 %v98
    %v138 = vpack.c.b16 %v123, %v122
    %v139 = vpack.c.b16 %v125, %v124
    %v140 = vpack.c.b16 %v127, %v126
    %v141 = vpack.c.b16 %v129, %v128
    %v142 = vpack.c.b16 %v131, %v130
    %v143 = vpack.c.b16 %v133, %v132
    %v144 = vpack.c.b16 %v135, %v134
    %v145 = vpack.c.b16 %v137, %v136
    %154 = vmatprep.subr.bf16.mxu0 0
    %155 = vmatpush1.bf16.msra.mxu0 %v138
    %156 = vmatprep.subr.bf16.mxu0 0
    %157 = vmatpush1.bf16.msra.mxu0 %v139
    %158 = vmatprep.subr.bf16.mxu0 0
    %159 = vmatpush1.bf16.msra.mxu0 %v140
    %160 = vmatprep.subr.bf16.mxu0 0
    %161 = vmatpush1.bf16.msra.mxu0 %v141
    %162 = vmatprep.subr.bf16.mxu0 0
    %163 = vmatpush1.bf16.msra.mxu0 %v142
    %164 = vmatprep.subr.bf16.mxu0 0
    %165 = vmatpush1.bf16.msra.mxu0 %v143
    %166 = vmatprep.subr.bf16.mxu0 0
    %167 = vmatpush1.bf16.msra.mxu0 %v144
    %168 = vmatprep.subr.bf16.mxu0 0
    %169 = vmatpush1.bf16.msra.mxu0 %v145
    %170 = vmatprep.subr.bf16.mxu0 0
    %171 = vmatpush1.bf16.msra.mxu0 0
    %172 = vmatprep.subr.bf16.mxu0 0
    %173 = vmatpush1.bf16.msra.mxu0 0
    %174 = vmatprep.subr.bf16.mxu0 0
    %175 = vmatpush1.bf16.msra.mxu0 0
    %176 = vmatprep.subr.bf16.mxu0 0
    %177 = vmatpush1.bf16.msra.mxu0 0
    %178 = vmatprep.subr.bf16.mxu0 0
    %179 = vmatpush1.bf16.msra.mxu0 0
    %180 = vmatprep.subr.bf16.mxu0 0
    %181 = vmatpush1.bf16.msra.mxu0 0
    %182 = vmatprep.subr.bf16.mxu0 0
    %183 = vmatpush1.bf16.msra.mxu0 0
    %184 = vmatprep.subr.bf16.mxu0 0
    %185 = vmatpush1.bf16.msra.mxu0 0
    %186 = vmatprep.mubr.bf16.mxu0 0
    %187 = vmatmul.mubr.bf16.gmra.mrb[0].mxu0 %v82
    %v188 = vpop.f32.mrb[0].mxu0
    %v189 = vadd.f32 %v104, %v188
    %v190 = vpop.f32.mrb[0].mxu0
    %v191 = vpop.f32.mrb[0].mxu0
    %v192 = vpop.f32.mrb[0].mxu0
    %193 = vdwg.mxu0
    %v194 = vxor.u32 %v189, 2147483648
    %v195 = vmul.f32 %v194, 1.442695
    %v196 = vpow.pop %v195
    %v197 = vadd.f32 %v196, 1.0
    %v198 = vrcp.pop %v197
    %v199 = vmul.f32 1.0, %v198
    %v200 = vmul.f32 %v189, %v199
    %v201 = vpack.c.bf16 %v200, %v200
    %v202 = vld [vmem:[#allocation10] sm:$0xf]
    %v203 = vld [vmem:[#allocation10 + $0x4] sm:$0xf]
    %v204 = vld [vmem:[#allocation10 + $0x8] sm:$0xf]
    %v205 = vld [vmem:[#allocation10 + $0xc] sm:$0xf]
    %v206 = vld [vmem:[#allocation10 + $0x10] sm:$0xf]
    %v207 = vld [vmem:[#allocation10 + $0x14] sm:$0xf]
    %v208 = vld [vmem:[#allocation10 + $0x18] sm:$0xf]
    %v209 = vld [vmem:[#allocation10 + $0x1c] sm:$0xf]
    %v210 = vld [vmem:[#allocation10 + $0x20] sm:$0xf]
    %v211 = vld [vmem:[#allocation10 + $0x24] sm:$0xf]
    %v212 = vld [vmem:[#allocation10 + $0x28] sm:$0xf]
    %v213 = vld [vmem:[#allocation10 + $0x2c] sm:$0xf]
    %v214 = vld [vmem:[#allocation10 + $0x30] sm:$0xf]
    %v215 = vld [vmem:[#allocation10 + $0x34] sm:$0xf]
    %v216 = vld [vmem:[#allocation10 + $0x38] sm:$0xf]
    %v217 = vld [vmem:[#allocation10 + $0x3c] sm:$0xf]
    %v218 = vld [vmem:[%s5] sm:$0x1]
    %v220 = vlaneseq
    %v221 = vshrl.u32 %v220, 7
    %v222 = vsub.s32 0, %v221
    %v223 = vrot.slane %v218, %v222
    %v241 = vunpack.c.l.b16 %v202
    %v242 = vunpack.c.l.b16 %v203
    %v243 = vunpack.c.l.b16 %v204
    %v244 = vunpack.c.l.b16 %v205
    %v245 = vunpack.c.l.b16 %v206
    %v246 = vunpack.c.l.b16 %v207
    %v247 = vunpack.c.l.b16 %v208
    %v248 = vunpack.c.l.b16 %v209
    %v249 = vunpack.c.l.b16 %v210
    %v250 = vunpack.c.l.b16 %v211
    %v251 = vunpack.c.l.b16 %v212
    %v252 = vunpack.c.l.b16 %v213
    %v253 = vunpack.c.l.b16 %v214
    %v254 = vunpack.c.l.b16 %v215
    %v255 = vunpack.c.l.b16 %v216
    %v256 = vunpack.c.l.b16 %v217
    %v257 = vpack.c.b16 %v242, %v241
    %v258 = vpack.c.b16 %v244, %v243
    %v259 = vpack.c.b16 %v246, %v245
    %v260 = vpack.c.b16 %v248, %v247
    %v261 = vpack.c.b16 %v250, %v249
    %v262 = vpack.c.b16 %v252, %v251
    %v263 = vpack.c.b16 %v254, %v253
    %v264 = vpack.c.b16 %v256, %v255
    %273 = vmatprep.subr.bf16.mxu0 0
    %274 = vmatpush1.bf16.msra.mxu0 %v257
    %275 = vmatprep.subr.bf16.mxu0 0
    %276 = vmatpush1.bf16.msra.mxu0 %v258
    %277 = vmatprep.subr.bf16.mxu0 0
    %278 = vmatpush1.bf16.msra.mxu0 %v259
    %279 = vmatprep.subr.bf16.mxu0 0
    %280 = vmatpush1.bf16.msra.mxu0 %v260
    %281 = vmatprep.subr.bf16.mxu0 0
    %282 = vmatpush1.bf16.msra.mxu0 %v261
    %283 = vmatprep.subr.bf16.mxu0 0
    %284 = vmatpush1.bf16.msra.mxu0 %v262
    %285 = vmatprep.subr.bf16.mxu0 0
    %286 = vmatpush1.bf16.msra.mxu0 %v263
    %287 = vmatprep.subr.bf16.mxu0 0
    %288 = vmatpush1.bf16.msra.mxu0 %v264
    %289 = vmatprep.subr.bf16.mxu0 0
    %290 = vmatpush1.bf16.msra.mxu0 0
    %291 = vmatprep.subr.bf16.mxu0 0
    %292 = vmatpush1.bf16.msra.mxu0 0
    %293 = vmatprep.subr.bf16.mxu0 0
    %294 = vmatpush1.bf16.msra.mxu0 0
    %295 = vmatprep.subr.bf16.mxu0 0
    %296 = vmatpush1.bf16.msra.mxu0 0
    %297 = vmatprep.subr.bf16.mxu0 0
    %298 = vmatpush1.bf16.msra.mxu0 0
    %299 = vmatprep.subr.bf16.mxu0 0
    %300 = vmatpush1.bf16.msra.mxu0 0
    %301 = vmatprep.subr.bf16.mxu0 0
    %302 = vmatpush1.bf16.msra.mxu0 0
    %303 = vmatprep.subr.bf16.mxu0 0
    %304 = vmatpush1.bf16.msra.mxu0 0
    %305 = vmatprep.mubr.bf16.mxu0 0
    %306 = vmatmul.mubr.bf16.gmra.mrb[0].mxu0 %v201
    %v307 = vpop.f32.mrb[0].mxu0
    %v308 = vadd.f32 %v223, %v307
    %v309 = vpop.f32.mrb[0].mxu0
    %v310 = vpop.f32.mrb[0].mxu0
    %v311 = vpop.f32.mrb[0].mxu0
    %312 = vdwg.mxu0
    %313 = vst [vmem:[#allocation11] sm:$0xff] %v308
    // Predicated region
    $region41: #{tpu_custom_call.1} parent=1 // pred_check
      _
    $region42: #{tpu_custom_call.1} parent=1 // pred_check_branch
      %315 = sbr.rel (0) target = $region44
    $region43: #{tpu_custom_call.1} parent=1 // pred_region
      %s317 = ssub.s32 128, 128
      %318 = vsyncadd [#allocation7], %s317
      %s320 = sshll.u32 [#allocation11], 4
      %s321 = int_to_ptr.vmem [resolvable:$true] %s320
      %323 = dma.vmem_to_hbm [thread:$0]  %s321, 128, %s6, [#allocation7]
    $region44: #{tpu_custom_call.1} parent=1 // pred_fallthru
      _
    // Predicated region
    $region45: #{tpu_custom_call.1} parent=1 // pred_check
      _
    $region46: #{tpu_custom_call.1} parent=1 // pred_check_branch
      %325 = sbr.rel (0) target = $region48
    $region47: #{tpu_custom_call.1} parent=1 // pred_region
      %326 = dma.done [#allocation7], 128
    $region48: #{tpu_custom_call.1} parent=1 // pred_fallthru
      _
    %327 = vsyncpa [#allocation6], 1
    %328 = vsyncpa [#allocation9], 1
    %329 = vsyncpa [#allocation7], 1

</llo_original>
